<compile_context>
chip_gen: v5e
topology: v5e:2x2
jax: 0.10.0
libtpu: 0.0.40
codegen_flags: <defaults>
</compile_context>

<pallas_src>
import jax
import jax.numpy as jnp
from jax.experimental import pallas as pl
from jax.experimental.pallas import tpu as pltpu


def _round_up(x, m):
    return ((x + m - 1) // m) * m


def _make_fused_kernel(n_parts):
    """Kernel: o = sum_p dot(x_p, w_p) + bias   (f32 accumulate on MXU)."""

    def kernel(*refs):
        x_refs = refs[:n_parts]
        w_refs = refs[n_parts:2 * n_parts]
        b_ref = refs[2 * n_parts]
        o_ref = refs[2 * n_parts + 1]

        acc = jnp.dot(x_refs[0][...], w_refs[0][...],
                      preferred_element_type=jnp.float32)
        for p in range(1, n_parts):
            acc = acc + jnp.dot(x_refs[p][...], w_refs[p][...],
                                preferred_element_type=jnp.float32)
        # bias add once per output tile (epilogue, stays in f32)
        o_ref[...] = (acc + b_ref[...]).astype(o_ref.dtype)

    return kernel


def fused_concat_linear(parts, w_parts, bias_row, *, out_dtype=jnp.float32):
    """y = concat(parts, axis=1) @ concat(w_parts, axis=0) + bias_row.

    parts:    tuple of [M_pad, d_k] f32   (M_pad multiple of 8)
    w_parts:  tuple of [d_k, N_pad] f32   (N_pad multiple of 128)
    bias_row: [1, N_pad] f32
    """
    n_parts = len(parts)
    m_pad = parts[0].shape[0]
    n_pad = w_parts[0].shape[1]
    k_total = sum(int(p.shape[1]) for p in parts)

    # Tile sizes: sublane-dense rows (multiple of 8), lane-dense cols
    # (multiple of 128). Modest caps keep double-buffered tiles well inside
    # v7x's 32 MiB scoped-VMEM default.
    tm = min(256, m_pad)
    if m_pad % tm:
        tm = 8
    tn = min(512, n_pad)
    if n_pad % tn:
        tn = 128

    grid = (m_pad // tm, n_pad // tn)

    x_specs = [pl.BlockSpec((tm, int(p.shape[1])), lambda i, j: (i, 0))
               for p in parts]
    w_specs = [pl.BlockSpec((int(w.shape[0]), tn), lambda i, j: (0, j))
               for w in w_parts]
    b_spec = pl.BlockSpec((1, tn), lambda i, j: (0, j))

    cost = pl.CostEstimate(
        flops=2 * m_pad * k_total * n_pad,
        transcendentals=0,
        bytes_accessed=4 * (m_pad * k_total + k_total * n_pad + m_pad * n_pad),
    )

    return pl.pallas_call(
        _make_fused_kernel(n_parts),
        out_shape=jax.ShapeDtypeStruct((m_pad, n_pad), out_dtype),
        grid_spec=pltpu.PrefetchScalarGridSpec(
            num_scalar_prefetch=0,
            grid=grid,
            in_specs=x_specs + w_specs + [b_spec],
            out_specs=pl.BlockSpec((tm, tn), lambda i, j: (i, j)),
        ),
        compiler_params=pltpu.CompilerParams(
            dimension_semantics=("parallel", "parallel"),
        ),
        cost_estimate=cost,
    )(*parts, *w_parts, bias_row)


class ModelPallas:
    """JAX/Pallas port of the PyTorch Model(dim_in, dim_out)."""

    def __init__(self, dim_in, dim_out, key):
        kw, kb = jax.random.split(key)
        bound = 1.0 / jnp.sqrt(dim_in)
        self.dim_in = dim_in
        self.dim_out = dim_out
        # PyTorch-layout parameters (for reference/export).
        self.weight = jax.random.uniform(
            kw, (dim_out, dim_in), jnp.float32, -bound, bound)
        self.bias = jax.random.uniform(
            kb, (dim_out,), jnp.float32, -bound, bound)

        # Kernel-layout parameters, built ONCE:
        #   transposed weight [dim_in, N_pad] with output dim padded to a
        #   lane-dense multiple of 128 (zero columns -> sliced off later),
        #   bias padded to the same width.
        self.n_pad = max(128, _round_up(dim_out, 128))
        w_t = jnp.transpose(self.weight)                    # [dim_in, dim_out]
        self.weight_t = jnp.pad(w_t, ((0, 0), (0, self.n_pad - dim_out)))
        self.bias_row = jnp.pad(
            self.bias, (0, self.n_pad - dim_out)).reshape(1, self.n_pad)

        # Cache of per-part weight row-slices, keyed by the remote feature
        # widths, so the split happens once per remote layout (not per call).
        self._w_split_cache = {}

    def _weight_parts(self, widths):
        widths = tuple(int(w) for w in widths)
        if widths not in self._w_split_cache:
            offs = [0]
            for w in widths:
                offs.append(offs[-1] + w)
            assert offs[-1] == self.dim_in, "remote feature dims must sum to dim_in"
            self._w_split_cache[widths] = tuple(
                self.weight_t[offs[i]:offs[i + 1], :]
                for i in range(len(widths)))
        return self._w_split_cache[widths]

    def forward(self, remote):
        # self.connect = remote  (pure Python bookkeeping in the original;
        # no compute effect, omitted)
        parts = [remote[k] for k in remote.keys()]
        widths = tuple(int(p.shape[1]) for p in parts)
        w_parts = self._weight_parts(widths)

        batch = int(parts[0].shape[0])
        m_pad = max(8, _round_up(batch, 8))
        if m_pad != batch:
            parts = [jnp.pad(p, ((0, m_pad - batch), (0, 0))) for p in parts]

        y_pad = fused_concat_linear(tuple(parts), w_parts, self.bias_row)
        return y_pad[:batch, :self.dim_out]

    __call__ = forward


if __name__ == "__main__":
    key = jax.random.PRNGKey(0)
    k_model, k_a, k_b = jax.random.split(key, 3)

    batch = 4
    # two "remote" partial feature tensors, concatenated along dim 1
    remote = {
        "part_a": jax.random.normal(k_a, (batch, 16), jnp.float32),
        "part_b": jax.random.normal(k_b, (batch, 16), jnp.float32),
    }
    dim_in = 16 + 16
    dim_out = 32

    model = ModelPallas(dim_in, dim_out, k_model)
    y = model(remote)
    y = jax.block_until_ready(y)

    # reference check in plain JAX
    x_ref = jnp.concatenate([remote["part_a"], remote["part_b"]], axis=1)
    y_ref = x_ref @ model.weight.T + model.bias
    assert y.shape == (batch, dim_out)
    assert jnp.allclose(y, y_ref, atol=1e-5, rtol=1e-5)

    print("KERNEL_OK")
</pallas_src>

<mosaic_0001>
module attributes {stable_mosaic.version = 11 : i64} {
  func.func @kernel(%arg0: i32, %arg1: i32, %arg2: memref<8x16xf32, #tpu.memory_space<vmem>>, %arg3: memref<8x16xf32, #tpu.memory_space<vmem>>, %arg4: memref<16x128xf32, #tpu.memory_space<vmem>>, %arg5: memref<16x128xf32, #tpu.memory_space<vmem>>, %arg6: memref<1x128xf32, #tpu.memory_space<vmem>>, %arg7: memref<8x128xf32, #tpu.memory_space<vmem>>) attributes {dimension_semantics = [#tpu.dimension_semantics<parallel>, #tpu.dimension_semantics<parallel>], iteration_bounds = array<i64: 1, 1>, scalar_prefetch = 0 : i64, scratch_operands = 0 : i64, tpu.core_type = #tpu.core_type<tc>, window_params = [{transform_indices = @transform_0, window_bounds = array<i64: 8, 16>}, {transform_indices = @transform_1, window_bounds = array<i64: 8, 16>}, {transform_indices = @transform_2, window_bounds = array<i64: 16, 128>}, {transform_indices = @transform_3, window_bounds = array<i64: 16, 128>}, {transform_indices = @transform_4, window_bounds = array<i64: 1, 128>}, {transform_indices = @transform_5, window_bounds = array<i64: 8, 128>}]} {
    %c0 = arith.constant 0 : index
    %c0_0 = arith.constant 0 : index
    %0 = vector.load %arg2[%c0, %c0_0] : memref<8x16xf32, #tpu.memory_space<vmem>>, vector<8x16xf32>
    %c0_1 = arith.constant 0 : index
    %c0_2 = arith.constant 0 : index
    %1 = vector.load %arg4[%c0_1, %c0_2] : memref<16x128xf32, #tpu.memory_space<vmem>>, vector<16x128xf32>
    %cst = arith.constant dense<0.000000e+00> : vector<8x128xf32>
    %2 = tpu.matmul %0, %1, %cst {dimension_numbers = #tpu.dot_dimension_numbers<[1], [0], [0], [1], [0, 0, 1, 1], [], []>} : vector<8x16xf32>, vector<16x128xf32>, vector<8x128xf32> -> vector<8x128xf32>
    %c0_3 = arith.constant 0 : index
    %c0_4 = arith.constant 0 : index
    %3 = vector.load %arg3[%c0_3, %c0_4] : memref<8x16xf32, #tpu.memory_space<vmem>>, vector<8x16xf32>
    %c0_5 = arith.constant 0 : index
    %c0_6 = arith.constant 0 : index
    %4 = vector.load %arg5[%c0_5, %c0_6] : memref<16x128xf32, #tpu.memory_space<vmem>>, vector<16x128xf32>
    %cst_7 = arith.constant dense<0.000000e+00> : vector<8x128xf32>
    %5 = tpu.matmul %3, %4, %cst_7 {dimension_numbers = #tpu.dot_dimension_numbers<[1], [0], [0], [1], [0, 0, 1, 1], [], []>} : vector<8x16xf32>, vector<16x128xf32>, vector<8x128xf32> -> vector<8x128xf32>
    %6 = arith.addf %2, %5 : vector<8x128xf32>
    %c0_8 = arith.constant 0 : index
    %c0_9 = arith.constant 0 : index
    %7 = vector.load %arg6[%c0_8, %c0_9] : memref<1x128xf32, #tpu.memory_space<vmem>>, vector<1x128xf32>
    %8 = vector.broadcast %7 : vector<1x128xf32> to vector<8x128xf32>
    %9 = arith.addf %6, %8 : vector<8x128xf32>
    %c0_10 = arith.constant 0 : index
    %c0_11 = arith.constant 0 : index
    %10 = vector.load %arg7[%c0_10, %c0_11] : memref<8x128xf32, #tpu.memory_space<vmem>>, vector<8x128xf32>
    tpu.vector_store %arg7[%c0_10, %c0_11], %9 {strides = array<i32>} : memref<8x128xf32, #tpu.memory_space<vmem>>, vector<8x128xf32>,
    return
  }
  func.func @transform_0(%arg0: i32, %arg1: i32) -> (i32, i32) {
    %c0_i32 = arith.constant 0 : i32
    %c0_i32_0 = arith.constant 0 : i32
    return %arg0, %c0_i32 : i32, i32
  }
  func.func @transform_1(%arg0: i32, %arg1: i32) -> (i32, i32) {
    %c0_i32 = arith.constant 0 : i32
    %c0_i32_0 = arith.constant 0 : i32
    return %arg0, %c0_i32 : i32, i32
  }
  func.func @transform_2(%arg0: i32, %arg1: i32) -> (i32, i32) {
    %c0_i32 = arith.constant 0 : i32
    %c0_i32_0 = arith.constant 0 : i32
    return %c0_i32, %arg1 : i32, i32
  }
  func.func @transform_3(%arg0: i32, %arg1: i32) -> (i32, i32) {
    %c0_i32 = arith.constant 0 : i32
    %c0_i32_0 = arith.constant 0 : i32
    return %c0_i32, %arg1 : i32, i32
  }
  func.func @transform_4(%arg0: i32, %arg1: i32) -> (i32, i32) {
    %c0_i32 = arith.constant 0 : i32
    %c0_i32_0 = arith.constant 0 : i32
    return %c0_i32, %arg1 : i32, i32
  }
  func.func @transform_5(%arg0: i32, %arg1: i32) -> (i32, i32) {
    %c0_i32 = arith.constant 0 : i32
    return %arg0, %arg1 : i32, i32
  }
}

</mosaic_0001>

<llo_original>
// kernel: tpu_custom_call.1
$region0: #{tpu_custom_call.1}
  #allocation0 [shape = 'u32[]', space=smem, size = 0x4, offset = 0x4, fixed_abs, tag = 'smem constant byte address 0x4 - core index']
  #allocation1 [shape = 'u32[72,128]{1,0:T(1,128)}', space=vmem, size = 0x9000, scoped, tag = 'internal scratch']
  %s0 = inlined_call_operand.hbm [shape: f32[8,16], index: 0, kind: input, shape index: {}]
  %s1 = inlined_call_operand.hbm [shape: f32[8,16], index: 1, kind: input, shape index: {}]
  %s2 = inlined_call_operand.hbm [shape: f32[16,128], index: 2, kind: input, shape index: {}]
  %s3 = inlined_call_operand.hbm [shape: f32[16,128], index: 3, kind: input, shape index: {}]
  %s4 = inlined_call_operand.vmem [shape: f32[1,128], index: 4, kind: input, shape index: {}]
  %s5 = inlined_call_operand.hbm [shape: f32[8,128], index: 5, kind: output, shape index: {}]
  %s6 = sld [smem:[#allocation0]]
  $region46: #{tpu_custom_call.1} parent=0
    _
  %s8 = ssub.s32 1, %s6
  %s9 = scalar_select 0, %s8, %s6
  $region1: #{tpu_custom_call.1} parent=0
    #allocation2 [shape = 'u8[4096]{0}', space=vmem, size = 0x1000, scoped, tag = 'input window, operand 0, single buffered']
    #allocation3 [shape = 's32[1]{0}', space=sflag, size = 0x4, scoped, tag = 'scoped memory for tpu_custom_call.1']
    #allocation4 [shape = 's32[1]{0}', space=sflag, size = 0x4, scoped, tag = 'scoped memory for tpu_custom_call.1']
    #allocation5 [shape = 'u8[4096]{0}', space=vmem, size = 0x1000, scoped, tag = 'input window, operand 1, single buffered']
    #allocation6 [shape = 's32[1]{0}', space=sflag, size = 0x4, scoped, tag = 'scoped memory for tpu_custom_call.1']
    #allocation7 [shape = 'u8[8192]{0}', space=vmem, size = 0x2000, scoped, tag = 'input window, operand 2, single buffered']
    #allocation8 [shape = 'u8[8192]{0}', space=vmem, size = 0x2000, scoped, tag = 'input window, operand 3, single buffered']
    #allocation9 [shape = 's32[1]{0}', space=sflag, size = 0x4, scoped, tag = 'scoped memory for tpu_custom_call.1']
    #allocation10 [shape = 'u8[4096]{0}', space=vmem, size = 0x1000, scoped, tag = 'output window, operand 0, single buffered']
    %10 = vsyncpa [#allocation3], 0
    %11 = vsyncpa [#allocation6], 0
    %12 = vsyncpa [#allocation9], 0
    %13 = vsyncpa [#allocation4], 0
    // Predicated region
    $region2: #{tpu_custom_call.1} parent=1 // pred_check
      _
    $region3: #{tpu_custom_call.1} parent=1 // pred_check_branch
      %15 = sbr.rel (0) target = $region5
    $region4: #{tpu_custom_call.1} parent=1 // pred_region
      %17 = vsyncadd [#allocation3], 0
      %s19 = sshll.u32 %s0, 4
      %s20 = int_to_ptr.hbm [resolvable:$true] %s19
      %s21 = sshll.u32 [#allocation2], 4
      %s22 = int_to_ptr.vmem [resolvable:$true] %s21
      %24 = dma.hbm_to_vmem [thread:$0]  %s20, 128, %s22, [#allocation3]
    $region5: #{tpu_custom_call.1} parent=1 // pred_fallthru
      _
    // Predicated region
    $region6: #{tpu_custom_call.1} parent=1 // pred_check
      _
    $region7: #{tpu_custom_call.1} parent=1 // pred_check_branch
      %26 = sbr.rel (0) target = $region9
    $region8: #{tpu_custom_call.1} parent=1 // pred_region
      %28 = vsyncadd [#allocation6], 0
      %s30 = sshll.u32 %s1, 4
      %s31 = int_to_ptr.hbm [resolvable:$true] %s30
      %s32 = sshll.u32 [#allocation5], 4
      %s33 = int_to_ptr.vmem [resolvable:$true] %s32
      %35 = dma.hbm_to_vmem [thread:$0]  %s31, 128, %s33, [#allocation6]
    $region9: #{tpu_custom_call.1} parent=1 // pred_fallthru
      _
    // Predicated region
    $region10: #{tpu_custom_call.1} parent=1 // pred_check
      _
    $region11: #{tpu_custom_call.1} parent=1 // pred_check_branch
      %37 = sbr.rel (0) target = $region13
    $region12: #{tpu_custom_call.1} parent=1 // pred_region
      %39 = vsyncadd [#allocation6], 0
      %s40 = sshll.u32 %s2, 4
      %s41 = int_to_ptr.hbm [resolvable:$true] %s40
      %s42 = sshll.u32 [#allocation7], 4
      %s43 = int_to_ptr.vmem [resolvable:$true] %s42
      %48 = dma.hbm_to_vmem [thread:$0]  %s41, 256, %s43, [#allocation6], 128, 128, 8
    $region13: #{tpu_custom_call.1} parent=1 // pred_fallthru
      _
    // Predicated region
    $region14: #{tpu_custom_call.1} parent=1 // pred_check
      _
    $region15: #{tpu_custom_call.1} parent=1 // pred_check_branch
      %50 = sbr.rel (0) target = $region17
    $region16: #{tpu_custom_call.1} parent=1 // pred_region
      %52 = vsyncadd [#allocation9], 0
      %s53 = sshll.u32 %s3, 4
      %s54 = int_to_ptr.hbm [resolvable:$true] %s53
      %s55 = sshll.u32 [#allocation8], 4
      %s56 = int_to_ptr.vmem [resolvable:$true] %s55
      %61 = dma.hbm_to_vmem [thread:$0]  %s54, 256, %s56, [#allocation9], 128, 128, 8
    $region17: #{tpu_custom_call.1} parent=1 // pred_fallthru
      _
    // Predicated region
    $region18: #{tpu_custom_call.1} parent=1 // pred_check
      _
    $region19: #{tpu_custom_call.1} parent=1 // pred_check_branch
      %63 = sbr.rel (0) target = $region21
    $region20: #{tpu_custom_call.1} parent=1 // pred_region
      _
    $region21: #{tpu_custom_call.1} parent=1 // pred_fallthru
      _
    // Predicated region
    $region22: #{tpu_custom_call.1} parent=1 // pred_check
      _
    $region23: #{tpu_custom_call.1} parent=1 // pred_check_branch
      %65 = sbr.rel (0) target = $region25
    $region24: #{tpu_custom_call.1} parent=1 // pred_region
      %67 = dma.done [#allocation3], 128
    $region25: #{tpu_custom_call.1} parent=1 // pred_fallthru
      _
    // Predicated region
    $region26: #{tpu_custom_call.1} parent=1 // pred_check
      _
    $region27: #{tpu_custom_call.1} parent=1 // pred_check_branch
      %69 = sbr.rel (0) target = $region29
    $region28: #{tpu_custom_call.1} parent=1 // pred_region
      %71 = dma.done [#allocation6], 128
    $region29: #{tpu_custom_call.1} parent=1 // pred_fallthru
      _
    // Predicated region
    $region30: #{tpu_custom_call.1} parent=1 // pred_check
      _
    $region31: #{tpu_custom_call.1} parent=1 // pred_check_branch
      %73 = sbr.rel (0) target = $region33
    $region32: #{tpu_custom_call.1} parent=1 // pred_region
      %75 = dma.done [#allocation6], 256
    $region33: #{tpu_custom_call.1} parent=1 // pred_fallthru
      _
    // Predicated region
    $region34: #{tpu_custom_call.1} parent=1 // pred_check
      _
    $region35: #{tpu_custom_call.1} parent=1 // pred_check_branch
      %77 = sbr.rel (0) target = $region37
    $region36: #{tpu_custom_call.1} parent=1 // pred_region
      %79 = dma.done [#allocation9], 256
    $region37: #{tpu_custom_call.1} parent=1 // pred_fallthru
      _
    %v80 = vld [vmem:[#allocation2] sm:$0xff]
    %v81 = vld [vmem:[#allocation7] sm:$0xff]
    %v82 = vld [vmem:[#allocation7 + $0x8] sm:$0xff]
    %v83 = vld [vmem:[#allocation5] sm:$0xff]
    %v84 = vld [vmem:[#allocation8] sm:$0xff]
    %v85 = vld [vmem:[#allocation8 + $0x8] sm:$0xff]
    %vm86 = vcmask 130048
    %v88 = vsel %vm86, %v83, 0
    %90 = vmatpush.msra.mxu0 0.0
    %91 = vmatpush.msra.mxu0 0.0
    %92 = vmatpush.msra.mxu0 0.0
    %93 = vmatpush.msra.mxu0 0.0
    %94 = vmatpush.msra.mxu0 0.0
    %95 = vmatpush.msra.mxu0 0.0
    %96 = vmatpush.msra.mxu0 0.0
    %97 = vmatpush.msra.mxu0 0.0
    %98 = vmatpush.msra.mxu0 0.0
    %99 = vmatpush.msra.mxu0 0.0
    %100 = vmatpush.msra.mxu0 0.0
    %101 = vmatpush.msra.mxu0 0.0
    %102 = vmatpush.msra.mxu0 0.0
    %103 = vmatpush.msra.mxu0 0.0
    %104 = vmatpush.msra.mxu0 %v85
    %105 = vmatpush.msra.mxu0 %v84
    %106 = vmatmul.f32.gmra.mxu0 %v88
    %v107 = vpop.f32.mrf.mxu0
    %v108 = vadd.f32 0.0, %v107
    %109 = vdwg.mxu0
    %v111 = vsel %vm86, %v80, 0
    %113 = vmatpush.msra.mxu0 0.0
    %114 = vmatpush.msra.mxu0 0.0
    %115 = vmatpush.msra.mxu0 0.0
    %116 = vmatpush.msra.mxu0 0.0
    %117 = vmatpush.msra.mxu0 0.0
    %118 = vmatpush.msra.mxu0 0.0
    %119 = vmatpush.msra.mxu0 0.0
    %120 = vmatpush.msra.mxu0 0.0
    %121 = vmatpush.msra.mxu0 0.0
    %122 = vmatpush.msra.mxu0 0.0
    %123 = vmatpush.msra.mxu0 0.0
    %124 = vmatpush.msra.mxu0 0.0
    %125 = vmatpush.msra.mxu0 0.0
    %126 = vmatpush.msra.mxu0 0.0
    %127 = vmatpush.msra.mxu0 %v82
    %128 = vmatpush.msra.mxu0 %v81
    %129 = vmatmul.f32.gmra.mxu0 %v111
    %v130 = vpop.f32.mrf.mxu0
    %v131 = vadd.f32 %v108, %v130
    %132 = vdwg.mxu0
    %v133 = vld [vmem:[%s4] sm:$0x1]
    %v135 = vperm.slane %v133, 0
    %v137 = vadd.f32 %v131, %v135
    %138 = vst [vmem:[#allocation10] sm:$0xff] %v137
    // Predicated region
    $region38: #{tpu_custom_call.1} parent=1 // pred_check
      _
    $region39: #{tpu_custom_call.1} parent=1 // pred_check_branch
      %140 = sbr.rel (0) target = $region41
    $region40: #{tpu_custom_call.1} parent=1 // pred_region
      %142 = vsyncadd [#allocation4], 0
      %s144 = sshll.u32 [#allocation10], 4
      %s145 = int_to_ptr.vmem [resolvable:$true] %s144
      %s146 = sshll.u32 %s5, 4
      %s147 = int_to_ptr.hbm [resolvable:$true] %s146
      %149 = dma.vmem_to_hbm [thread:$0]  %s145, 128, %s147, [#allocation4]
    $region41: #{tpu_custom_call.1} parent=1 // pred_fallthru
      _
    // Predicated region
    $region42: #{tpu_custom_call.1} parent=1 // pred_check
      _
    $region43: #{tpu_custom_call.1} parent=1 // pred_check_branch
      %151 = sbr.rel (0) target = $region45
    $region44: #{tpu_custom_call.1} parent=1 // pred_region
      %153 = dma.done [#allocation4], 128
    $region45: #{tpu_custom_call.1} parent=1 // pred_fallthru
      _
    %154 = vsyncpa [#allocation3], 1
    %155 = vsyncpa [#allocation6], 1
    %156 = vsyncpa [#allocation9], 1
    %157 = vsyncpa [#allocation4], 1

</llo_original>
